<compile_context>
chip_gen: v7x
topology: tpu7x:2x2x1
jax: 0.10.0
libtpu: 0.0.40
codegen_flags: <defaults>
</compile_context>

<pallas_src>
from functools import partial

import jax
import jax.numpy as jnp
from jax.experimental import pallas as pl
from jax.experimental.pallas import tpu as pltpu


# ----------------------------- tiling helpers ------------------------------

def _pick_tile(dim, unit, cap):
    """Largest multiple of `unit` that divides `dim` and is <= cap.

    Falls back to the full dim when `dim` is not a multiple of `unit`
    (full-extent blocks are always legal)."""
    if dim % unit != 0:
        return dim
    best = unit
    t = unit
    while t <= cap and t <= dim:
        if dim % t == 0:
            best = t
        t += unit
    return best


# ----------------------------- Pallas kernels ------------------------------

def _bn_stats_kernel(x_ref, sum_ref, sq_ref):
    """Per-channel sum / sum-of-squares reduction.

    grid = (C_tiles, N, HW_tiles); the (N, HW) axes are the reduction; the
    outputs (C, 1) use the same block index across them, so they stay resident
    in VMEM and act as f32 accumulators."""
    first = jnp.logical_and(pl.program_id(1) == 0, pl.program_id(2) == 0)

    @pl.when(first)
    def _():
        sum_ref[...] = jnp.zeros_like(sum_ref)
        sq_ref[...] = jnp.zeros_like(sq_ref)

    x = x_ref[...].astype(jnp.float32)          # (TC, THW)
    sum_ref[...] += jnp.sum(x, axis=-1, keepdims=True)
    sq_ref[...] += jnp.sum(x * x, axis=-1, keepdims=True)


def _bn_apply_kernel(x_ref, scale_ref, shift_ref, o_ref):
    """Elementwise y = x * scale[c] + shift[c] (one FMA per element)."""
    x = x_ref[...].astype(jnp.float32)          # (TC, THW)
    o_ref[...] = (x * scale_ref[...] + shift_ref[...]).astype(o_ref.dtype)


# ------------------------------ JAX wrapper --------------------------------

def batch_norm_forward(x, running_mean, running_var, weight, bias,
                       training, momentum=0.1, eps=1e-5):
    """Mirrors torch.nn.functional.batch_norm for NCHW input.

    Returns (out, new_running_mean, new_running_var)."""
    N, C, H, W = x.shape
    HW = H * W
    L = N * HW
    x3 = x.reshape(N, C, HW)                    # free reshape, no transpose

    TC = _pick_tile(C, 8, 128)                  # sublane tile (or full C)
    THW = _pick_tile(HW, 128, 4096)             # lane tile (or full HW)
    grid = (C // TC, N, HW // THW)

    x_spec = pl.BlockSpec((None, TC, THW), lambda c, n, hw: (n, c, hw))
    cvec_spec = pl.BlockSpec((TC, 1), lambda c, n, hw: (c, 0))

    w = weight.astype(jnp.float32)
    b = bias.astype(jnp.float32)

    if training:
        sums, sqs = pl.pallas_call(
            _bn_stats_kernel,
            out_shape=(jax.ShapeDtypeStruct((C, 1), jnp.float32),
                       jax.ShapeDtypeStruct((C, 1), jnp.float32)),
            grid=grid,
            in_specs=[x_spec],
            out_specs=(cvec_spec, cvec_spec),
            compiler_params=pltpu.CompilerParams(
                dimension_semantics=("parallel", "arbitrary", "arbitrary")),
        )(x3)

        inv_L = 1.0 / L                          # full reduction size N*H*W
        mean = sums[:, 0] * inv_L
        var = jnp.maximum(sqs[:, 0] * inv_L - mean * mean, 0.0)  # biased var

        inv_std = jax.lax.rsqrt(var + eps)
        scale = w * inv_std
        shift = b - mean * scale

        # F.batch_norm updates running stats with the *unbiased* batch var.
        var_unbiased = var * (L / max(L - 1, 1))
        new_running_mean = (1.0 - momentum) * running_mean + momentum * mean
        new_running_var = (1.0 - momentum) * running_var + momentum * var_unbiased
    else:
        rm = running_mean.astype(jnp.float32)
        rv = running_var.astype(jnp.float32)
        inv_std = jax.lax.rsqrt(rv + eps)
        scale = w * inv_std
        shift = b - rm * scale
        new_running_mean, new_running_var = running_mean, running_var

    out3 = pl.pallas_call(
        _bn_apply_kernel,
        out_shape=jax.ShapeDtypeStruct((N, C, HW), x.dtype),
        grid=grid,
        in_specs=[x_spec, cvec_spec, cvec_spec],
        out_specs=x_spec,
        compiler_params=pltpu.CompilerParams(
            dimension_semantics=("parallel", "parallel", "parallel")),
    )(x3, scale.reshape(C, 1), shift.reshape(C, 1))

    return out3.reshape(N, C, H, W), new_running_mean, new_running_var


# --------------------------- Module equivalent -----------------------------

class BatchNormPallas:
    """JAX/Pallas equivalent of the PyTorch `_BatchNorm` module (2d usage)."""

    def __init__(self, num_features, *, key, eps=1e-5, momentum=0.1,
                 sig1=0.1, sig2=0.4, pi=0.5, rho=-3.0):
        self.num_features = num_features
        self.eps = eps
        self.momentum = momentum
        self.rho = rho
        self.sig1, self.sig2, self.pi = sig1, sig2, pi

        k = jax.random.split(key, 6)
        f = num_features
        # Same init distributions as the PyTorch module (note: running_var
        # initialized with normal(0, 1) per the spec, so it can be negative;
        # eval-mode rsqrt(var+eps) would then be NaN — faithful to the spec).
        self.weight_mu = 0.1 * jax.random.normal(k[0], (f,), jnp.float32)
        self.weight_rho = rho + 0.1 * jax.random.normal(k[1], (f,), jnp.float32)
        self.bias_mu = 0.1 * jax.random.normal(k[2], (f,), jnp.float32)
        self.bias_rho = rho + 0.1 * jax.random.normal(k[3], (f,), jnp.float32)
        self.running_mean = jax.random.normal(k[4], (f,), jnp.float32)
        self.running_var = jax.random.normal(k[5], (f,), jnp.float32)
        self.training = True  # torch modules are constructed in training mode
        self.track_running_stats = True

    def forward(self, x, sample=False, sample_key=None):
        if self.training or sample:
            # TODO(synk): VariationalPosterior definition not provided; assume the
            # standard Bayes-by-Backprop reparameterization w = mu + log1p(exp(rho))*eps.
            kw, kb = jax.random.split(
                sample_key if sample_key is not None else jax.random.PRNGKey(42))
            weight = self.weight_mu + jnp.log1p(jnp.exp(self.weight_rho)) * \
                jax.random.normal(kw, self.weight_mu.shape, jnp.float32)
            bias = self.bias_mu + jnp.log1p(jnp.exp(self.bias_rho)) * \
                jax.random.normal(kb, self.bias_mu.shape, jnp.float32)
        else:
            weight = self.weight_mu
            bias = self.bias_mu
        # TODO(synk): log_prior / log_variational_posterior bookkeeping (scalar
        # side attributes, not part of the returned tensor) is omitted.
        out, new_rm, new_rv = batch_norm_forward(
            x, self.running_mean, self.running_var, weight, bias,
            training=(self.training or not self.track_running_stats),
            momentum=self.momentum, eps=self.eps)
        if self.training and self.track_running_stats:
            self.running_mean, self.running_var = new_rm, new_rv
        return out, weight, bias


# ------------------------------- Reference ---------------------------------

def _ref_batch_norm_train(x, weight, bias, eps):
    mean = jnp.mean(x, axis=(0, 2, 3), keepdims=True)
    var = jnp.mean((x - mean) ** 2, axis=(0, 2, 3), keepdims=True)
    w = weight.reshape(1, -1, 1, 1)
    b = bias.reshape(1, -1, 1, 1)
    return (x - mean) * jax.lax.rsqrt(var + eps) * w + b


def _ref_batch_norm_eval(x, rm, rv, weight, bias, eps):
    rm = rm.reshape(1, -1, 1, 1)
    rv = rv.reshape(1, -1, 1, 1)
    w = weight.reshape(1, -1, 1, 1)
    b = bias.reshape(1, -1, 1, 1)
    return (x - rm) * jax.lax.rsqrt(rv + eps) * w + b


# --------------------------------- Main ------------------------------------

if __name__ == "__main__":
    key = jax.random.PRNGKey(0)
    k_param, k_x = jax.random.split(key)

    N, C, H, W = 2, 4, 16, 16
    x = jax.random.normal(k_x, (N, C, H, W), jnp.float32)

    bn = BatchNormPallas(C, key=k_param)
    rm0, rv0 = bn.running_mean, bn.running_var

    # ---- training-mode forward (batch stats) ----
    out, weight, bias = bn.forward(x, sample=False,
                                   sample_key=jax.random.PRNGKey(1))
    out = jax.block_until_ready(out)

    ref = _ref_batch_norm_train(x, weight, bias, bn.eps)
    assert out.shape == (N, C, H, W)
    assert bool(jnp.all(jnp.isfinite(out)))
    assert bool(jnp.allclose(out, ref, atol=1e-4, rtol=1e-4)), "train mismatch"

    # running-stats update check (unbiased batch variance, momentum mixing)
    L = N * H * W
    bmean = jnp.mean(x, axis=(0, 2, 3))
    bvar = jnp.mean((x - bmean.reshape(1, -1, 1, 1)) ** 2, axis=(0, 2, 3))
    bvar_u = bvar * (L / (L - 1))
    ref_rm = (1 - bn.momentum) * rm0 + bn.momentum * bmean
    ref_rv = (1 - bn.momentum) * rv0 + bn.momentum * bvar_u
    assert bool(jnp.allclose(bn.running_mean, ref_rm, atol=1e-4, rtol=1e-4))
    assert bool(jnp.allclose(bn.running_var, ref_rv, atol=1e-4, rtol=1e-4))

    # ---- eval-mode path (running stats folded into scale/shift) ----
    safe_var = jnp.abs(rv0) + 0.5  # spec inits running_var ~ N(0,1); make PD for test
    out_eval, _, _ = batch_norm_forward(
        x, rm0, safe_var, weight, bias, training=False,
        momentum=bn.momentum, eps=bn.eps)
    out_eval = jax.block_until_ready(out_eval)
    ref_eval = _ref_batch_norm_eval(x, rm0, safe_var, weight, bias, bn.eps)
    assert bool(jnp.allclose(out_eval, ref_eval, atol=1e-4, rtol=1e-4)), "eval mismatch"

    print("KERNEL_OK")
</pallas_src>

<mosaic_0001>
module attributes {stable_mosaic.version = 11 : i64} {
  func.func @_bn_stats_kernel(%arg0: i32, %arg1: i32, %arg2: i32, %arg3: memref<1x4x256xf32, #tpu.memory_space<vmem>>, %arg4: memref<4x1xf32, #tpu.memory_space<vmem>>, %arg5: memref<4x1xf32, #tpu.memory_space<vmem>>) attributes {dimension_semantics = [#tpu.dimension_semantics<parallel>, #tpu.dimension_semantics<arbitrary>, #tpu.dimension_semantics<arbitrary>], iteration_bounds = array<i64: 1, 2, 1>, scalar_prefetch = 0 : i64, scratch_operands = 0 : i64, tpu.core_type = #tpu.core_type<tc>, window_params = [{transform_indices = @transform_0, window_bounds = array<i64: 1, 4, 256>}, {transform_indices = @transform_1, window_bounds = array<i64: 4, 1>}, {transform_indices = @transform_2, window_bounds = array<i64: 4, 1>}]} {
    %c0_i32 = arith.constant 0 : i32
    %0 = arith.cmpi eq, %arg1, %c0_i32 : i32
    %c0_i32_0 = arith.constant 0 : i32
    %1 = arith.cmpi eq, %arg2, %c0_i32_0 : i32
    %2 = arith.andi %0, %1 : i1
    %3 = arith.extui %2 : i1 to i32
    %c0_i32_1 = arith.constant 0 : i32
    %4 = arith.cmpi ne, %3, %c0_i32_1 : i32
    scf.if %4 {
      %cst_13 = arith.constant 0.000000e+00 : f32
      %18 = vector.broadcast %cst_13 : f32 to vector<4x1xf32>
      %c0_14 = arith.constant 0 : index
      %c0_15 = arith.constant 0 : index
      %19 = vector.load %arg4[%c0_14, %c0_15] : memref<4x1xf32, #tpu.memory_space<vmem>>, vector<4x1xf32>
      tpu.vector_store %arg4[%c0_14, %c0_15], %18 {strides = array<i32>} : memref<4x1xf32, #tpu.memory_space<vmem>>, vector<4x1xf32>,
      %cst_16 = arith.constant 0.000000e+00 : f32
      %20 = vector.broadcast %cst_16 : f32 to vector<4x1xf32>
      %c0_17 = arith.constant 0 : index
      %c0_18 = arith.constant 0 : index
      %21 = vector.load %arg5[%c0_17, %c0_18] : memref<4x1xf32, #tpu.memory_space<vmem>>, vector<4x1xf32>
      tpu.vector_store %arg5[%c0_17, %c0_18], %20 {strides = array<i32>} : memref<4x1xf32, #tpu.memory_space<vmem>>, vector<4x1xf32>,
    } else {
    }
    %c0 = arith.constant 0 : index
    %c0_2 = arith.constant 0 : index
    %c0_3 = arith.constant 0 : index
    %5 = vector.load %arg3[%c0, %c0_2, %c0_3] : memref<1x4x256xf32, #tpu.memory_space<vmem>>, vector<1x4x256xf32>
    %6 = vector.shape_cast %5 : vector<1x4x256xf32> to vector<4x256xf32>
    %c0_4 = arith.constant 0 : index
    %c0_5 = arith.constant 0 : index
    %7 = vector.load %arg4[%c0_4, %c0_5] : memref<4x1xf32, #tpu.memory_space<vmem>>, vector<4x1xf32>
    %cst = arith.constant dense<0.000000e+00> : vector<4xf32>
    %8 = vector.multi_reduction <add>, %6, %cst [1] : vector<4x256xf32> to vector<4xf32>
    %9 = vector.shape_cast %8 : vector<4xf32> to vector<4x1xf32>
    %10 = arith.addf %7, %9 : vector<4x1xf32>
    %c0_6 = arith.constant 0 : index
    %c0_7 = arith.constant 0 : index
    %11 = vector.load %arg4[%c0_6, %c0_7] : memref<4x1xf32, #tpu.memory_space<vmem>>, vector<4x1xf32>
    tpu.vector_store %arg4[%c0_6, %c0_7], %10 {strides = array<i32>} : memref<4x1xf32, #tpu.memory_space<vmem>>, vector<4x1xf32>,
    %c0_8 = arith.constant 0 : index
    %c0_9 = arith.constant 0 : index
    %12 = vector.load %arg5[%c0_8, %c0_9] : memref<4x1xf32, #tpu.memory_space<vmem>>, vector<4x1xf32>
    %13 = arith.mulf %6, %6 : vector<4x256xf32>
    %cst_10 = arith.constant dense<0.000000e+00> : vector<4xf32>
    %14 = vector.multi_reduction <add>, %13, %cst_10 [1] : vector<4x256xf32> to vector<4xf32>
    %15 = vector.shape_cast %14 : vector<4xf32> to vector<4x1xf32>
    %16 = arith.addf %12, %15 : vector<4x1xf32>
    %c0_11 = arith.constant 0 : index
    %c0_12 = arith.constant 0 : index
    %17 = vector.load %arg5[%c0_11, %c0_12] : memref<4x1xf32, #tpu.memory_space<vmem>>, vector<4x1xf32>
    tpu.vector_store %arg5[%c0_11, %c0_12], %16 {strides = array<i32>} : memref<4x1xf32, #tpu.memory_space<vmem>>, vector<4x1xf32>,
    return
  }
  func.func @transform_0(%arg0: i32, %arg1: i32, %arg2: i32) -> (i32, i32, i32) {
    %c0_i32 = arith.constant 0 : i32
    return %arg1, %arg0, %arg2 : i32, i32, i32
  }
  func.func @transform_1(%arg0: i32, %arg1: i32, %arg2: i32) -> (i32, i32) {
    %c0_i32 = arith.constant 0 : i32
    %c0_i32_0 = arith.constant 0 : i32
    return %arg0, %c0_i32 : i32, i32
  }
  func.func @transform_2(%arg0: i32, %arg1: i32, %arg2: i32) -> (i32, i32) {
    %c0_i32 = arith.constant 0 : i32
    %c0_i32_0 = arith.constant 0 : i32
    return %arg0, %c0_i32 : i32, i32
  }
}

</mosaic_0001>

<llo_original>
// kernel: tpu_custom_call.1
$region0: #{tpu_custom_call.1}
  #allocation0 [shape = 'u32[]', space=smem, size = 0x4, offset = 0x4, fixed_abs, tag = 'smem constant byte address 0x4 - core index']
  #allocation1 [shape = 'u32[144,128]{1,0:T(1,128)}', space=vmem, size = 0x12000, scoped, tag = 'internal scratch']
  %s0 = inlined_call_operand.hbm [shape: f32[2,4,256], index: 0, kind: input, shape index: {}]
  %s1 = inlined_call_operand.vmem [shape: f32[4,1], index: 1, kind: output, shape index: {0}]
  %s2 = inlined_call_operand.vmem [shape: f32[4,1], index: 2, kind: output, shape index: {1}]
  %3 = xla_tuple %s1, %s2
  %s4 = sld [smem:[#allocation0]]
  $region53: #{tpu_custom_call.1} parent=0
    _
  %s6 = ssub.s32 1, %s4
  %s7 = scalar_select 0, %s6, %s4
  $region1: #{tpu_custom_call.1} parent=0
    #allocation2 [shape = 'u8[8192]{0}', space=vmem, size = 0x2000, scoped, tag = 'input window, operand 0']
    #allocation3 [shape = 's32[2]{0}', space=sflag, size = 0x8, scoped, tag = 'scoped memory for tpu_custom_call.1']
    %8 = vsyncpa [#allocation3], 0
    %s9 = scalar_lea.sflag [#allocation3], 1
    %10 = vsyncpa %s9, 0
    loop: start=0, step=1, limit=4
    $region2: #{tpu_custom_call.1} parent=1 // loop_pre_header
      _
    $region3: #{tpu_custom_call.1} parent=1 // loop_header
      %s12 = sphi 0, %s16
      %p13 = scmp.ge.s32.totalorder %s12, 4
      %s19 = sphi 0, %s38
      %s20 = sphi 0, %s34
      %s21 = sphi 0, %s30
      %s22 = sphi 0, %s19
      %s23 = sphi 0, %s20
      %s24 = sphi 0, %s21
      %s25 = sphi 0, %s22
      %s26 = sphi 0, %s23
      %s27 = sphi 0, %s24
      %s45 = sphi 0, %s47
      %s48 = sphi 0, %s45
      %s49 = sphi 0, %s48
      %s65 = sphi 0, %s49
      %s71 = sphi 0, %s73
      %s74 = sphi 0, %s71
      %s75 = sphi 0, %s74
      %s91 = sphi 0, %s75
      %s97 = sphi 0, %s99
      %s100 = sphi 0, %s97
      %s101 = sphi 0, %s100
      %s117 = sphi 0, %s101
    $region4: #{tpu_custom_call.1} parent=1 // loop_header_branch
      %15 = sbr.rel (%p13) target = $region8
    $region5: #{tpu_custom_call.1} parent=1 // loop_body
      %s17 = ssub.s32 %s12, 1
      %s18 = ssub.s32 %s12, 2
      %s28 = sadd.s32 1, %s21
      %p29 = scmp.ge.s32.totalorder %s28, 1
      %s30 = scalar_select %p29, 0, %s28
      %s31 = sadd.s32 1, %s20
      %s32 = scalar_select %p29, %s31, %s20
      %p33 = scmp.ge.s32.totalorder %s32, 2
      %s34 = scalar_select %p33, 0, %s32
      %s35 = sadd.s32 1, %s19
      %s36 = scalar_select %p33, %s35, %s19
      %p37 = scmp.ge.s32.totalorder %s36, 1
      %s38 = scalar_select %p37, 0, %s36
      %s39 = ssub.s32 %s20, %s34
      %s40 = ssub.s32 %s19, %s38
      %s41 = sor.u32 %s39, %s40
      %s42 = ssub.s32 %s21, %s30
      %s43 = sor.u32 %s41, %s42
      %p44 = scmp.eq.s32.totalorder %s43, 0
      %s46 = sadd.s32 %s45, 1
      %s47 = scalar_select %p44, %s45, %s46
      %p50 = pneg %p44
      %p51 = scmp.eq.s32.totalorder %s12, 1
      %p52 = por %p50, %p51
      %p53 = scmp.ne.s32.totalorder %s45, %s48
      %p54 = scmp.eq.s32.totalorder %s12, 0
      %p55 = por %p53, %p54
      %p56 = scmp.ne.s32.totalorder %s45, %s48
      %p57 = scmp.eq.s32.totalorder %s17, 1
      %p58 = por %p56, %p57
      %p59 = scmp.ne.s32.totalorder %s48, %s49
      %p60 = scmp.eq.s32.totalorder %s17, 0
      %p61 = por %p59, %p60
      %p62 = scmp.ne.s32.totalorder %s48, %s49
      %p63 = scmp.eq.s32.totalorder %s18, 1
      %p64 = por %p62, %p63
      %p66 = scmp.ne.s32.totalorder %s49, %s65
      %p67 = scmp.eq.s32.totalorder %s18, 0
      %p68 = por %p66, %p67
      %s69 = ssub.s32 %s19, %s38
      %p70 = scmp.eq.s32.totalorder %s69, 0
      %s72 = sadd.s32 %s71, 1
      %s73 = scalar_select %p70, %s71, %s72
      %p76 = pneg %p70
      %p77 = scmp.eq.s32.totalorder %s12, 1
      %p78 = por %p76, %p77
      %p79 = scmp.ne.s32.totalorder %s71, %s74
      %p80 = scmp.eq.s32.totalorder %s12, 0
      %p81 = por %p79, %p80
      %p82 = scmp.ne.s32.totalorder %s71, %s74
      %p83 = scmp.eq.s32.totalorder %s17, 1
      %p84 = por %p82, %p83
      %p85 = scmp.ne.s32.totalorder %s74, %s75
      %p86 = scmp.eq.s32.totalorder %s17, 0
      %p87 = por %p85, %p86
      %p88 = scmp.ne.s32.totalorder %s74, %s75
      %p89 = scmp.eq.s32.totalorder %s18, 1
      %p90 = por %p88, %p89
      %p92 = scmp.ne.s32.totalorder %s75, %s91
      %p93 = scmp.eq.s32.totalorder %s18, 0
      %p94 = por %p92, %p93
      %s95 = ssub.s32 %s19, %s38
      %p96 = scmp.eq.s32.totalorder %s95, 0
      %s98 = sadd.s32 %s97, 1
      %s99 = scalar_select %p96, %s97, %s98
      %p102 = pneg %p96
      %p103 = scmp.eq.s32.totalorder %s12, 1
      %p104 = por %p102, %p103
      %p105 = scmp.ne.s32.totalorder %s97, %s100
      %p106 = scmp.eq.s32.totalorder %s12, 0
      %p107 = por %p105, %p106
      %p108 = scmp.ne.s32.totalorder %s97, %s100
      %p109 = scmp.eq.s32.totalorder %s17, 1
      %p110 = por %p108, %p109
      %p111 = scmp.ne.s32.totalorder %s100, %s101
      %p112 = scmp.eq.s32.totalorder %s17, 0
      %p113 = por %p111, %p112
      %p114 = scmp.ne.s32.totalorder %s100, %s101
      %p115 = scmp.eq.s32.totalorder %s18, 1
      %p116 = por %p114, %p115
      %p118 = scmp.ne.s32.totalorder %s101, %s117
      %p119 = scmp.eq.s32.totalorder %s18, 0
      %p120 = por %p118, %p119
      %p121 = scmp.le.s32.totalorder 1, %s12
      %p122 = scmp.lt.s32.totalorder %s12, 3
      %p123 = pnand %p121, %p122
      %p124 = pneg %p123
      // Predicated region
      $region9: #{tpu_custom_call.1} parent=5 // pred_check
        _
      $region10: #{tpu_custom_call.1} parent=5 // pred_check_branch
        %126 = sbr.rel (%p123) target = $region12
      $region11: #{tpu_custom_call.1} parent=5 // pred_region
        %s127 = ssub.s32 %s12, 1
      $region12: #{tpu_custom_call.1} parent=5 // pred_fallthru
        _
      %p128 = scmp.lt.s32.totalorder %s12, 2
      // Predicated region
      $region13: #{tpu_custom_call.1} parent=5 // pred_check
        %p129 = pneg %p128
      $region14: #{tpu_custom_call.1} parent=5 // pred_check_branch
        %131 = sbr.rel (%p129) target = $region16
      $region15: #{tpu_custom_call.1} parent=5 // pred_region
        // Predicated region
        $region17: #{tpu_custom_call.1} parent=15 // pred_check
          %p132 = pneg %p55
        $region18: #{tpu_custom_call.1} parent=15 // pred_check_branch
          %134 = sbr.rel (%p132) target = $region20
        $region19: #{tpu_custom_call.1} parent=15 // pred_region
          %s135 = sand.u32 %s45, 1
          %s136 = scalar_lea.sflag [#allocation3], %s135
          %s137 = sand.u32 %s45, 1
          %s138 = smul.addr %s137, 8
          %s139 = scalar_lea.vmem [#allocation2], %s138
          %s140 = smul.u32 2, %s21
          %s142 = ssub.s32 128, 128
          %143 = vsyncadd %s136, %s142
          %s144 = smul.addr %s19, 2
          %s145 = sadd.s32 %s140, %s144
          %s146 = smul.addr %s20, 2
          %s147 = sadd.s32 %s145, %s146
          %s148 = smul.addr %s147, 64
          %s149 = scalar_lea.hbm %s0, %s148
          %s151 = sshll.u32 %s139, 4
          %s152 = int_to_ptr.vmem [resolvable:$true] %s151
          %154 = dma.hbm_to_vmem [thread:$0]  %s149, 128, %s152, %s136
        $region20: #{tpu_custom_call.1} parent=15 // pred_fallthru
          _
      $region16: #{tpu_custom_call.1} parent=5 // pred_fallthru
        _
      %p155 = scmp.le.s32.totalorder 1, %s12
      %p156 = scmp.lt.s32.totalorder %s12, 3
      %p157 = pnand %p155, %p156
      %p158 = pneg %p157
      // Predicated region
      $region21: #{tpu_custom_call.1} parent=5 // pred_check
        _
      $region22: #{tpu_custom_call.1} parent=5 // pred_check_branch
        %160 = sbr.rel (%p157) target = $region24
      $region23: #{tpu_custom_call.1} parent=5 // pred_region
        %s161 = ssub.s32 %s12, 1
        %s162 = sand.u32 %s48, 1
        %s163 = scalar_lea.sflag [#allocation3], %s162
        %s164 = sand.u32 %s48, 1
        %s165 = smul.addr %s164, 8
        %s166 = scalar_lea.vmem [#allocation2], %s165
        // Predicated region
        $region25: #{tpu_custom_call.1} parent=23 // pred_check
          %p167 = pneg %p61
        $region26: #{tpu_custom_call.1} parent=23 // pred_check_branch
          %169 = sbr.rel (%p167) target = $region28
        $region27: #{tpu_custom_call.1} parent=23 // pred_region
          %170 = dma.done %s163, 128
        $region28: #{tpu_custom_call.1} parent=23 // pred_fallthru
          _
        %s171 = sand.u32 %s48, 1
        %s172 = scalar_lea.sflag [#allocation3], %s171
        %s173 = sand.u32 %s48, 1
        %s174 = smul.addr %s173, 8
        %s175 = scalar_lea.vmem [#allocation2], %s174
        %p176 = pneg %p61
        %p177 = pneg %p58
        %p178 = pneg %p87
        %p179 = pneg %p84
        %p180 = scmp.lt.s32.totalorder %s22, 0
        %s181 = scalar_select %p180, %s22, 0
        %s182 = smul.addr %s181, 4
        %s183 = scalar_lea.vmem %s1, %s182
        %p184 = pneg %p113
        %p185 = pneg %p110
        %p186 = scmp.lt.s32.totalorder %s22, 0
        %s187 = scalar_select %p186, %s22, 0
        %s188 = smul.addr %s187, 4
        %s189 = scalar_lea.vmem %s2, %s188
        %s190 = smul.u32 2, %s24
        %p191 = scmp.lt.s32.totalorder %s22, 0
        %s192 = scalar_select %p191, %s22, 0
        %s193 = smul.addr %s192, 4
        %s194 = scalar_lea.vmem %s1, %s193
        %p195 = scmp.lt.s32.totalorder %s22, 0
        %s196 = scalar_select %p195, %s22, 0
        %s197 = smul.addr %s196, 4
        %s198 = scalar_lea.vmem %s2, %s197
        %p199 = scmp.eq.s32.totalorder %s23, 0
        %p200 = scmp.eq.s32.totalorder %s24, 0
        %p201 = pnand %p199, %p200
        %p202 = pneg %p201
        // Predicated region
        $region29: #{tpu_custom_call.1} parent=23 // pred_check
          _
        $region30: #{tpu_custom_call.1} parent=23 // pred_check_branch
          %204 = sbr.rel (%p201) target = $region32
        $region31: #{tpu_custom_call.1} parent=23 // pred_region
          %vm205 = vcmask 3072
          %206 = vst.msk [vmem:[%s194] sm:$0xf] %vm205, 0.0
          %207 = vst.msk [vmem:[%s198] sm:$0xf] %vm205, 0.0
        $region32: #{tpu_custom_call.1} parent=23 // pred_fallthru
          _
        %v208 = vld [vmem:[%s166] sm:$0xff]
        %v209 = vld [vmem:[%s194] sm:$0xf]
        %v211 = vcombine.high %v208, %v208
        %vm213 = vcmask 1043456
        %v214 = vsel %vm213, %v208, 0.0
        %v215 = vsel %vm213, %v211, 0.0
        %v216 = vadd.f32 %v214, %v215
        %217 = vadd.xlane.f32.xlu0 %v216
        %v218 = vpop.xlane.xlu0 %217
        %v219 = vadd.f32 %v209, %v218
        %vm220 = vcmask 3072
        %221 = vst.msk [vmem:[%s194] sm:$0xf] %vm220, %v219
        %v222 = vld [vmem:[%s198] sm:$0xf]
        %v223 = vmul.f32 %v208, %v208
        %v225 = vcombine.high %v223, %v223
        %v227 = vsel %vm213, %v223, 0.0
        %v228 = vsel %vm213, %v225, 0.0
        %v229 = vadd.f32 %v227, %v228
        %230 = vadd.xlane.f32.xlu0 %v229
        %v231 = vpop.xlane.xlu0 %230
        %v232 = vadd.f32 %v222, %v231
        %233 = vst.msk [vmem:[%s198] sm:$0xf] %vm220, %v232
        %p234 = scmp.lt.s32.totalorder %s22, 0
        %s235 = scalar_select %p234, %s22, 0
        %s236 = smul.addr %s235, 4
        %s237 = scalar_lea.vmem %s1, %s236
        %p238 = scmp.lt.s32.totalorder %s22, 0
        %s239 = scalar_select %p238, %s22, 0
        %s240 = smul.addr %s239, 4
        %s241 = scalar_lea.vmem %s2, %s240
        // Predicated region
        $region33: #{tpu_custom_call.1} parent=23 // pred_check
          %p242 = pneg %p84
        $region34: #{tpu_custom_call.1} parent=23 // pred_check_branch
          %244 = sbr.rel (%p242) target = $region36
        $region35: #{tpu_custom_call.1} parent=23 // pred_region
          _
        $region36: #{tpu_custom_call.1} parent=23 // pred_fallthru
          _
        // Predicated region
        $region37: #{tpu_custom_call.1} parent=23 // pred_check
          %p245 = pneg %p110
        $region38: #{tpu_custom_call.1} parent=23 // pred_check_branch
          %247 = sbr.rel (%p245) target = $region40
        $region39: #{tpu_custom_call.1} parent=23 // pred_region
          _
        $region40: #{tpu_custom_call.1} parent=23 // pred_fallthru
          _
        // Predicated region
        $region41: #{tpu_custom_call.1} parent=23 // pred_check
          %p248 = pneg %p84
        $region42: #{tpu_custom_call.1} parent=23 // pred_check_branch
          %250 = sbr.rel (%p248) target = $region44
        $region43: #{tpu_custom_call.1} parent=23 // pred_region
          %p251 = scmp.lt.s32.totalorder %s22, 0
          %s252 = scalar_select %p251, %s22, 0
          %s253 = smul.addr %s252, 4
          %s254 = scalar_lea.vmem %s1, %s253
        $region44: #{tpu_custom_call.1} parent=23 // pred_fallthru
          _
        // Predicated region
        $region45: #{tpu_custom_call.1} parent=23 // pred_check
          %p255 = pneg %p110
        $region46: #{tpu_custom_call.1} parent=23 // pred_check_branch
          %257 = sbr.rel (%p255) target = $region48
        $region47: #{tpu_custom_call.1} parent=23 // pred_region
          %p258 = scmp.lt.s32.totalorder %s22, 0
          %s259 = scalar_select %p258, %s22, 0
          %s260 = smul.addr %s259, 4
          %s261 = scalar_lea.vmem %s2, %s260
        $region48: #{tpu_custom_call.1} parent=23 // pred_fallthru
          _
      $region24: #{tpu_custom_call.1} parent=5 // pred_fallthru
        _
      %p262 = scmp.le.s32.totalorder 2, %s12
      // Predicated region
      $region49: #{tpu_custom_call.1} parent=5 // pred_check
        %p263 = pneg %p262
      $region50: #{tpu_custom_call.1} parent=5 // pred_check_branch
        %265 = sbr.rel (%p263) target = $region52
      $region51: #{tpu_custom_call.1} parent=5 // pred_region
        %s266 = ssub.s32 %s12, 2
      $region52: #{tpu_custom_call.1} parent=5 // pred_fallthru
        _
    $region6: #{tpu_custom_call.1} parent=1 // loop_footer
      %s16 = sadd.s32 1, %s12
    $region7: #{tpu_custom_call.1} parent=1 // loop_footer_branch
      %11 = sbr.rel target = $region3
    $region8: #{tpu_custom_call.1} parent=1 // loop_exit
      _
    %267 = vsyncpa [#allocation3], 1
    %s268 = scalar_lea.sflag [#allocation3], 1
    %269 = vsyncpa %s268, 1

</llo_original>
